<compile_context>
chip_gen: v7x
topology: tpu7x:2x2x1
jax: 0.10.0
libtpu: 0.0.40
codegen_flags: <defaults>
</compile_context>

<pallas_src>
import jax
import jax.numpy as jnp
from jax.experimental import pallas as pl
from jax.experimental.pallas import tpu as pltpu

IN_VIDEO = 128
IN_AUDIO = 128
IN_MOTION = 1
HIDDEN = 64
IN_TOTAL = IN_VIDEO + IN_AUDIO + IN_MOTION  # 257

MAX_TILE_B = 4096      # rows per grid step; fits default scoped VMEM on v5e/v6e/v7x
MIN_TILE_B = 512       # don't shrink tiles below this just to add grid steps
MIN_GRID_STEPS = 4     # keep both v7x TensorCores busy for large batches


def _cdiv(a, b):
    return -(-a // b)


def _round_up(x, m):
    return _cdiv(x, m) * m


def fusion_mlp_kernel(video_ref, audio_ref, motion_ref, w1v_ref, w1a_ref,
                      misc_ref, out_ref):
    # video_ref : (TB, 128) bf16     audio_ref : (TB, 128) bf16
    # motion_ref: (1, 1, TB) f32     out_ref   : (1, 1, TB) f32   (batch on lanes)
    # w1v_ref   : (128, 64) bf16     w1a_ref   : (128, 64) bf16
    # misc_ref  : (4, 64)  f32  rows = [w1_motion ; b1 ; w2 ; b2 broadcast]

    # Linear(257 -> 64): two clean K=128 MXU matmuls with f32 accumulation ...
    h = jnp.dot(video_ref[...], w1v_ref[...], preferred_element_type=jnp.float32)
    h = h + jnp.dot(audio_ref[...], w1a_ref[...], preferred_element_type=jnp.float32)

    # ... plus a VPU rank-1 update for the single motion column.  Motion arrives
    # lane-dense; the lane->sublane relayout is cheap XLU work hidden under the DMAs.
    motion_col = jnp.transpose(motion_ref[0])       # (1, TB) -> (TB, 1)
    w1m_row = misc_ref[0:1, :]                      # (1, 64)
    b1_row = misc_ref[1:2, :]                       # (1, 64)
    h = h + motion_col * w1m_row + b1_row
    h = jnp.maximum(h, 0.0)                         # ReLU

    # Dropout(0.3): identity in eval mode.

    # Linear(64 -> 1) + Sigmoid: VPU multiply + lane reduction (no N=1 MXU matmul),
    # then transpose the (TB,1) logit column to a lane-dense (1,TB) row so the output
    # block is written with unmasked, dense stores.
    w2_row = misc_ref[2:3, :]                       # (1, 64)
    b2 = misc_ref[3, 0]                             # scalar
    logit_col = jnp.sum(h * w2_row, axis=-1, keepdims=True)   # (TB, 1)
    logit_row = jnp.transpose(logit_col) + b2                  # (1, TB)
    out_ref[0] = jax.nn.sigmoid(logit_row).astype(out_ref.dtype)


def fusion_model_forward(video_feat, audio_feat, motion_feat, params):
    """Mirrors FusionModel.forward (eval mode). Returns shape (B,)."""
    if motion_feat.ndim == 1:
        motion_feat = motion_feat[:, None]           # torch unsqueeze(1)

    B = video_feat.shape[0]
    w1, b1, w2, b2 = params  # (257,64), (1,64), (64,1), (1,1)

    # Split the first-layer weight: two K=128 MXU slabs + the motion row.
    # Streamed features / big weight slabs go bf16 (MXU-native, half the HBM bytes);
    # ideally the upstream producer already emits bf16 so this cast fuses away.
    w1v = w1[:IN_VIDEO].astype(jnp.bfloat16)                      # (128, 64)
    w1a = w1[IN_VIDEO:IN_VIDEO + IN_AUDIO].astype(jnp.bfloat16)   # (128, 64)
    video_bf = video_feat.astype(jnp.bfloat16)
    audio_bf = audio_feat.astype(jnp.bfloat16)

    # Pack the remaining tiny params into one resident (4,64) f32 buffer.
    misc = jnp.concatenate([
        w1[IN_VIDEO + IN_AUDIO:].astype(jnp.float32),             # w1_motion (1,64)
        b1.reshape(1, HIDDEN).astype(jnp.float32),                # b1        (1,64)
        w2.reshape(1, HIDDEN).astype(jnp.float32),                # w2        (1,64)
        jnp.broadcast_to(b2.astype(jnp.float32).reshape(1, 1), (1, HIDDEN)),
    ], axis=0)                                                    # (4, 64)

    # Batch tile: multiple of 8 rows, <= MAX_TILE_B, >= MIN_GRID_STEPS steps for big
    # batches (v7x megacore), never larger than the 8-aligned batch itself.
    tb = _round_up(_cdiv(B, MIN_GRID_STEPS), 8)
    tb = max(MIN_TILE_B, min(MAX_TILE_B, tb))
    tb = min(tb, _round_up(B, 8))
    n_tiles = _cdiv(B, tb)

    # video/audio are NOT padded: the last block may run past B; those rows are
    # garbage but the op is strictly row-wise and they are sliced off below.
    # motion is tiny, so pad it to n_tiles*tb and lay it out lane-dense per tile.
    motion_flat = motion_feat.reshape(-1).astype(jnp.float32)
    pad = n_tiles * tb - B
    if pad:
        motion_flat = jnp.pad(motion_flat, (0, pad))
    motion_tiles = motion_flat.reshape(n_tiles, 1, tb)

    resident = lambda shape: pl.BlockSpec(shape, lambda i: (0, 0))  # stays in VMEM

    out = pl.pallas_call(
        fusion_mlp_kernel,
        out_shape=jax.ShapeDtypeStruct((n_tiles, 1, tb), jnp.float32),
        grid=(n_tiles,),
        in_specs=[
            pl.BlockSpec((tb, IN_VIDEO), lambda i: (i, 0)),
            pl.BlockSpec((tb, IN_AUDIO), lambda i: (i, 0)),
            pl.BlockSpec((1, 1, tb), lambda i: (i, 0, 0)),
            resident((IN_VIDEO, HIDDEN)),
            resident((IN_AUDIO, HIDDEN)),
            resident((4, HIDDEN)),
        ],
        out_specs=pl.BlockSpec((1, 1, tb), lambda i: (i, 0, 0)),
        compiler_params=pltpu.CompilerParams(
            dimension_semantics=("parallel",),
            vmem_limit_bytes=32 * 1024 * 1024),
    )(video_bf, audio_bf, motion_tiles, w1v, w1a, misc)

    return out.reshape(-1)[:B]   # == classifier(x).squeeze(1)


def init_params(key):
    """Deterministic init matching nn.Linear shapes (stored transposed for matmul)."""
    k1, k2, k3, k4 = jax.random.split(key, 4)
    lim1 = 1.0 / jnp.sqrt(IN_TOTAL)
    lim2 = 1.0 / jnp.sqrt(HIDDEN)
    w1 = jax.random.uniform(k1, (IN_TOTAL, HIDDEN), jnp.float32, -lim1, lim1)
    b1 = jax.random.uniform(k2, (1, HIDDEN), jnp.float32, -lim1, lim1)
    w2 = jax.random.uniform(k3, (HIDDEN, 1), jnp.float32, -lim2, lim2)
    b2 = jax.random.uniform(k4, (1, 1), jnp.float32, -lim2, lim2)
    return (w1, b1, w2, b2)


if __name__ == "__main__":
    key = jax.random.PRNGKey(0)
    kp, kv, ka, km = jax.random.split(key, 4)

    B = 10  # not 8-aligned: exercises the no-pad / partial-block path
    video_feat = jax.random.normal(kv, (B, IN_VIDEO), jnp.float32)
    audio_feat = jax.random.normal(ka, (B, IN_AUDIO), jnp.float32)
    motion_feat = jax.random.normal(km, (B,), jnp.float32)  # exercises dim()==1 path

    params = init_params(kp)

    out = fusion_model_forward(video_feat, audio_feat, motion_feat, params)
    out = jax.block_until_ready(out)

    # sanity: shape (B,), finite, in (0,1) from sigmoid
    assert out.shape == (B,)
    assert bool(jnp.all(jnp.isfinite(out)))
    assert bool(jnp.all((out > 0.0) & (out < 1.0)))

    # cross-check against a pure-JAX f32 reference (same math as the PyTorch module);
    # tolerance loosened vs v1 because features/weights now stream through bf16.
    x = jnp.concatenate([video_feat, audio_feat, motion_feat[:, None]], axis=1)
    w1, b1, w2, b2 = params
    ref = jax.nn.sigmoid(jnp.maximum(x @ w1 + b1, 0.0) @ w2 + b2)[:, 0]
    assert jnp.allclose(out, ref, atol=2e-2, rtol=2e-2), (out, ref)

    print("KERNEL_OK")
</pallas_src>

<mosaic_0001>
module attributes {stable_mosaic.version = 11 : i64} {
  func.func @fusion_mlp_kernel(%arg0: i32, %arg1: memref<16x128xbf16, #tpu.memory_space<vmem>>, %arg2: memref<16x128xbf16, #tpu.memory_space<vmem>>, %arg3: memref<1x1x16xf32, #tpu.memory_space<vmem>>, %arg4: memref<128x64xbf16, #tpu.memory_space<vmem>>, %arg5: memref<128x64xbf16, #tpu.memory_space<vmem>>, %arg6: memref<4x64xf32, #tpu.memory_space<vmem>>, %arg7: memref<1x1x16xf32, #tpu.memory_space<vmem>>) attributes {dimension_semantics = [#tpu.dimension_semantics<parallel>], iteration_bounds = array<i64: 1>, scalar_prefetch = 0 : i64, scratch_operands = 0 : i64, tpu.core_type = #tpu.core_type<tc>, window_params = [{transform_indices = @transform_0, window_bounds = array<i64: 16, 128>}, {transform_indices = @transform_1, window_bounds = array<i64: 16, 128>}, {transform_indices = @transform_2, window_bounds = array<i64: 1, 1, 16>}, {pipeline_mode = #tpu.pipeline_mode<synchronous>, transform_indices = @transform_3, window_bounds = array<i64: 128, 64>}, {pipeline_mode = #tpu.pipeline_mode<synchronous>, transform_indices = @transform_4, window_bounds = array<i64: 128, 64>}, {pipeline_mode = #tpu.pipeline_mode<synchronous>, transform_indices = @transform_5, window_bounds = array<i64: 4, 64>}, {transform_indices = @transform_6, window_bounds = array<i64: 1, 1, 16>}]} {
    %c0 = arith.constant 0 : index
    %c0_0 = arith.constant 0 : index
    %0 = vector.load %arg1[%c0, %c0_0] : memref<16x128xbf16, #tpu.memory_space<vmem>>, vector<16x128xbf16>
    %c0_1 = arith.constant 0 : index
    %c0_2 = arith.constant 0 : index
    %1 = vector.load %arg4[%c0_1, %c0_2] : memref<128x64xbf16, #tpu.memory_space<vmem>>, vector<128x64xbf16>
    %cst = arith.constant dense<0.000000e+00> : vector<16x64xf32>
    %2 = tpu.matmul %0, %1, %cst {dimension_numbers = #tpu.dot_dimension_numbers<[1], [0], [0], [1], [0, 0, 1, 1], [], []>} : vector<16x128xbf16>, vector<128x64xbf16>, vector<16x64xf32> -> vector<16x64xf32>
    %c0_3 = arith.constant 0 : index
    %c0_4 = arith.constant 0 : index
    %3 = vector.load %arg2[%c0_3, %c0_4] : memref<16x128xbf16, #tpu.memory_space<vmem>>, vector<16x128xbf16>
    %c0_5 = arith.constant 0 : index
    %c0_6 = arith.constant 0 : index
    %4 = vector.load %arg5[%c0_5, %c0_6] : memref<128x64xbf16, #tpu.memory_space<vmem>>, vector<128x64xbf16>
    %cst_7 = arith.constant dense<0.000000e+00> : vector<16x64xf32>
    %5 = tpu.matmul %3, %4, %cst_7 {dimension_numbers = #tpu.dot_dimension_numbers<[1], [0], [0], [1], [0, 0, 1, 1], [], []>} : vector<16x128xbf16>, vector<128x64xbf16>, vector<16x64xf32> -> vector<16x64xf32>
    %6 = arith.addf %2, %5 : vector<16x64xf32>
    %c0_8 = arith.constant 0 : index
    %c0_9 = arith.constant 0 : index
    %c0_10 = arith.constant 0 : index
    %7 = vector.load %arg3[%c0_8, %c0_9, %c0_10] : memref<1x1x16xf32, #tpu.memory_space<vmem>>, vector<1x1x16xf32>
    %8 = vector.shape_cast %7 : vector<1x1x16xf32> to vector<1x16xf32>
    %9 = tpu.transpose %8, [1, 0] : vector<1x16xf32> -> vector<16x1xf32>
    %c0_11 = arith.constant 0 : index
    %c0_12 = arith.constant 0 : index
    %10 = vector.load %arg6[%c0_11, %c0_12] : memref<4x64xf32, #tpu.memory_space<vmem>>, vector<1x64xf32>
    %c1 = arith.constant 1 : index
    %c0_13 = arith.constant 0 : index
    %11 = vector.load %arg6[%c1, %c0_13] : memref<4x64xf32, #tpu.memory_space<vmem>>, vector<1x64xf32>
    %12 = vector.broadcast %9 : vector<16x1xf32> to vector<16x64xf32>
    %13 = vector.broadcast %10 : vector<1x64xf32> to vector<16x64xf32>
    %14 = arith.mulf %12, %13 : vector<16x64xf32>
    %15 = arith.addf %6, %14 : vector<16x64xf32>
    %16 = vector.broadcast %11 : vector<1x64xf32> to vector<16x64xf32>
    %17 = arith.addf %15, %16 : vector<16x64xf32>
    %cst_14 = arith.constant 0.000000e+00 : f32
    %18 = vector.broadcast %cst_14 : f32 to vector<16x64xf32>
    %19 = arith.maximumf %17, %18 : vector<16x64xf32>
    %c2 = arith.constant 2 : index
    %c0_15 = arith.constant 0 : index
    %20 = vector.load %arg6[%c2, %c0_15] : memref<4x64xf32, #tpu.memory_space<vmem>>, vector<1x64xf32>
    %c3 = arith.constant 3 : index
    %c0_16 = arith.constant 0 : index
    %21 = vector.load %arg6[%c3, %c0_16] : memref<4x64xf32, #tpu.memory_space<vmem>>, vector<1x1xf32>
    %22 = vector.extract %21[0, 0] : f32 from vector<1x1xf32>
    %23 = vector.broadcast %20 : vector<1x64xf32> to vector<16x64xf32>
    %24 = arith.mulf %19, %23 : vector<16x64xf32>
    %cst_17 = arith.constant dense<0.000000e+00> : vector<16xf32>
    %25 = vector.multi_reduction <add>, %24, %cst_17 [1] : vector<16x64xf32> to vector<16xf32>
    %26 = vector.shape_cast %25 : vector<16xf32> to vector<16x1xf32>
    %27 = tpu.transpose %26, [1, 0] : vector<16x1xf32> -> vector<1x16xf32>
    %28 = vector.broadcast %22 : f32 to vector<1x16xf32>
    %29 = arith.addf %27, %28 : vector<1x16xf32>
    %30 = arith.negf %29 : vector<1x16xf32>
    %31 = math.exp %30 : vector<1x16xf32>
    %cst_18 = arith.constant 1.000000e+00 : f32
    %32 = vector.broadcast %cst_18 : f32 to vector<1x16xf32>
    %33 = arith.addf %32, %31 : vector<1x16xf32>
    %34 = arith.divf %32, %33 : vector<1x16xf32>
    %c0_19 = arith.constant 0 : index
    %c0_20 = arith.constant 0 : index
    %c0_21 = arith.constant 0 : index
    %35 = vector.load %arg7[%c0_19, %c0_20, %c0_21] : memref<1x1x16xf32, #tpu.memory_space<vmem>>, vector<1x1x16xf32>
    %36 = vector.shape_cast %35 : vector<1x1x16xf32> to vector<1x16xf32>
    %37 = vector.shape_cast %34 : vector<1x16xf32> to vector<1x1x16xf32>
    tpu.vector_store %arg7[%c0_19, %c0_20, %c0_21], %37 {strides = array<i32>} : memref<1x1x16xf32, #tpu.memory_space<vmem>>, vector<1x1x16xf32>,
    return
  }
  func.func @transform_0(%arg0: i32) -> (i32, i32) {
    %c0_i32 = arith.constant 0 : i32
    %c0_i32_0 = arith.constant 0 : i32
    return %arg0, %c0_i32 : i32, i32
  }
  func.func @transform_1(%arg0: i32) -> (i32, i32) {
    %c0_i32 = arith.constant 0 : i32
    %c0_i32_0 = arith.constant 0 : i32
    return %arg0, %c0_i32 : i32, i32
  }
  func.func @transform_2(%arg0: i32) -> (i32, i32, i32) {
    %c0_i32 = arith.constant 0 : i32
    %c0_i32_0 = arith.constant 0 : i32
    %c0_i32_1 = arith.constant 0 : i32
    return %arg0, %c0_i32, %c0_i32_0 : i32, i32, i32
  }
  func.func @transform_3(%arg0: i32) -> (i32, i32) {
    %c0_i32 = arith.constant 0 : i32
    %c0_i32_0 = arith.constant 0 : i32
    %c0_i32_1 = arith.constant 0 : i32
    return %c0_i32, %c0_i32_0 : i32, i32
  }
  func.func @transform_4(%arg0: i32) -> (i32, i32) {
    %c0_i32 = arith.constant 0 : i32
    %c0_i32_0 = arith.constant 0 : i32
    %c0_i32_1 = arith.constant 0 : i32
    return %c0_i32, %c0_i32_0 : i32, i32
  }
  func.func @transform_5(%arg0: i32) -> (i32, i32) {
    %c0_i32 = arith.constant 0 : i32
    %c0_i32_0 = arith.constant 0 : i32
    %c0_i32_1 = arith.constant 0 : i32
    return %c0_i32, %c0_i32_0 : i32, i32
  }
  func.func @transform_6(%arg0: i32) -> (i32, i32, i32) {
    %c0_i32 = arith.constant 0 : i32
    %c0_i32_0 = arith.constant 0 : i32
    %c0_i32_1 = arith.constant 0 : i32
    return %arg0, %c0_i32, %c0_i32_0 : i32, i32, i32
  }
}

</mosaic_0001>

<llo_original>
// kernel: tpu_custom_call.1
$region0: #{tpu_custom_call.1}
  #allocation0 [shape = 'u32[]', space=smem, size = 0x4, offset = 0x4, fixed_abs, tag = 'smem constant byte address 0x4 - core index']
  #allocation1 [shape = 'u32[144,128]{1,0:T(1,128)}', space=vmem, size = 0x12000, scoped, tag = 'internal scratch']
  %s0 = inlined_call_operand.vmem [shape: bf16[10,128], index: 0, kind: input, shape index: {}]
  %s1 = inlined_call_operand.vmem [shape: bf16[10,128], index: 1, kind: input, shape index: {}]
  %s2 = inlined_call_operand.vmem [shape: f32[1,1,16], index: 2, kind: input, shape index: {}]
  %s3 = inlined_call_operand.vmem [shape: bf16[128,64], index: 3, kind: input, shape index: {}]
  %s4 = inlined_call_operand.vmem [shape: bf16[128,64], index: 4, kind: input, shape index: {}]
  %s5 = inlined_call_operand.vmem [shape: f32[4,64], index: 5, kind: input, shape index: {}]
  %s6 = inlined_call_operand.hbm [shape: f32[1,1,16], index: 6, kind: output, shape index: {}]
  %s7 = sld [smem:[#allocation0]]
  $region34: #{tpu_custom_call.1} parent=0
    _
  %s9 = ssub.s32 1, %s7
  %s10 = scalar_select 0, %s9, %s7
  $region1: #{tpu_custom_call.1} parent=0
    #allocation2 [shape = 'u8[512]{0}', space=vmem, size = 0x400, scoped, tag = 'output window, operand 0, single buffered']
    #allocation3 [shape = 's32[1]{0}', space=sflag, size = 0x4, scoped, tag = 'scoped memory for tpu_custom_call.1']
    %11 = vsyncpa [#allocation3], 0
    // Predicated region
    $region2: #{tpu_custom_call.1} parent=1 // pred_check
      _
    $region3: #{tpu_custom_call.1} parent=1 // pred_check_branch
      %13 = sbr.rel (0) target = $region5
    $region4: #{tpu_custom_call.1} parent=1 // pred_region
      _
    $region5: #{tpu_custom_call.1} parent=1 // pred_fallthru
      _
    // Predicated region
    $region6: #{tpu_custom_call.1} parent=1 // pred_check
      _
    $region7: #{tpu_custom_call.1} parent=1 // pred_check_branch
      %15 = sbr.rel (0) target = $region9
    $region8: #{tpu_custom_call.1} parent=1 // pred_region
      _
    $region9: #{tpu_custom_call.1} parent=1 // pred_fallthru
      _
    // Predicated region
    $region10: #{tpu_custom_call.1} parent=1 // pred_check
      _
    $region11: #{tpu_custom_call.1} parent=1 // pred_check_branch
      %17 = sbr.rel (0) target = $region13
    $region12: #{tpu_custom_call.1} parent=1 // pred_region
      _
    $region13: #{tpu_custom_call.1} parent=1 // pred_fallthru
      _
    // Predicated region
    $region14: #{tpu_custom_call.1} parent=1 // pred_check
      _
    $region15: #{tpu_custom_call.1} parent=1 // pred_check_branch
      %19 = sbr.rel (0) target = $region17
    $region16: #{tpu_custom_call.1} parent=1 // pred_region
      _
    $region17: #{tpu_custom_call.1} parent=1 // pred_fallthru
      _
    // Predicated region
    $region18: #{tpu_custom_call.1} parent=1 // pred_check
      _
    $region19: #{tpu_custom_call.1} parent=1 // pred_check_branch
      %21 = sbr.rel (0) target = $region21
    $region20: #{tpu_custom_call.1} parent=1 // pred_region
      _
    $region21: #{tpu_custom_call.1} parent=1 // pred_fallthru
      _
    // Predicated region
    $region22: #{tpu_custom_call.1} parent=1 // pred_check
      _
    $region23: #{tpu_custom_call.1} parent=1 // pred_check_branch
      %23 = sbr.rel (0) target = $region25
    $region24: #{tpu_custom_call.1} parent=1 // pred_region
      _
    $region25: #{tpu_custom_call.1} parent=1 // pred_fallthru
      _
    %v25 = vld [vmem:[%s0] sm:$0xf]
    %v26 = vld [vmem:[%s0 + $0x4] sm:$0xf]
    %v27 = vld [vmem:[%s3] sm:$0xf]
    %v28 = vld [vmem:[%s3 + $0x4] sm:$0xf]
    %v29 = vld [vmem:[%s3 + $0x8] sm:$0xf]
    %v30 = vld [vmem:[%s3 + $0xc] sm:$0xf]
    %v31 = vld [vmem:[%s3 + $0x10] sm:$0xf]
    %v32 = vld [vmem:[%s3 + $0x14] sm:$0xf]
    %v33 = vld [vmem:[%s3 + $0x18] sm:$0xf]
    %v34 = vld [vmem:[%s3 + $0x1c] sm:$0xf]
    %v35 = vld [vmem:[%s3 + $0x20] sm:$0xf]
    %v36 = vld [vmem:[%s3 + $0x24] sm:$0xf]
    %v37 = vld [vmem:[%s3 + $0x28] sm:$0xf]
    %v38 = vld [vmem:[%s3 + $0x2c] sm:$0xf]
    %v39 = vld [vmem:[%s3 + $0x30] sm:$0xf]
    %v40 = vld [vmem:[%s3 + $0x34] sm:$0xf]
    %v41 = vld [vmem:[%s3 + $0x38] sm:$0xf]
    %v42 = vld [vmem:[%s3 + $0x3c] sm:$0xf]
    %v43 = vld [vmem:[%s1] sm:$0xf]
    %v44 = vld [vmem:[%s1 + $0x4] sm:$0xf]
    %v45 = vld [vmem:[%s4] sm:$0xf]
    %v46 = vld [vmem:[%s4 + $0x4] sm:$0xf]
    %v47 = vld [vmem:[%s4 + $0x8] sm:$0xf]
    %v48 = vld [vmem:[%s4 + $0xc] sm:$0xf]
    %v49 = vld [vmem:[%s4 + $0x10] sm:$0xf]
    %v50 = vld [vmem:[%s4 + $0x14] sm:$0xf]
    %v51 = vld [vmem:[%s4 + $0x18] sm:$0xf]
    %v52 = vld [vmem:[%s4 + $0x1c] sm:$0xf]
    %v53 = vld [vmem:[%s4 + $0x20] sm:$0xf]
    %v54 = vld [vmem:[%s4 + $0x24] sm:$0xf]
    %v55 = vld [vmem:[%s4 + $0x28] sm:$0xf]
    %v56 = vld [vmem:[%s4 + $0x2c] sm:$0xf]
    %v57 = vld [vmem:[%s4 + $0x30] sm:$0xf]
    %v58 = vld [vmem:[%s4 + $0x34] sm:$0xf]
    %v59 = vld [vmem:[%s4 + $0x38] sm:$0xf]
    %v60 = vld [vmem:[%s4 + $0x3c] sm:$0xf]
    %v63 = vunpack.c.l.b16 %v43
    %v64 = vunpack.c.l.b16 %v44
    %v65 = vpack.c.b16 %v64, %v63
    %v83 = vunpack.c.l.b16 %v45
    %v84 = vunpack.c.l.b16 %v46
    %v85 = vunpack.c.l.b16 %v47
    %v86 = vunpack.c.l.b16 %v48
    %v87 = vunpack.c.l.b16 %v49
    %v88 = vunpack.c.l.b16 %v50
    %v89 = vunpack.c.l.b16 %v51
    %v90 = vunpack.c.l.b16 %v52
    %v91 = vunpack.c.l.b16 %v53
    %v92 = vunpack.c.l.b16 %v54
    %v93 = vunpack.c.l.b16 %v55
    %v94 = vunpack.c.l.b16 %v56
    %v95 = vunpack.c.l.b16 %v57
    %v96 = vunpack.c.l.b16 %v58
    %v97 = vunpack.c.l.b16 %v59
    %v98 = vunpack.c.l.b16 %v60
    %v99 = vpack.c.b16 %v84, %v83
    %v100 = vpack.c.b16 %v86, %v85
    %v101 = vpack.c.b16 %v88, %v87
    %v102 = vpack.c.b16 %v90, %v89
    %v103 = vpack.c.b16 %v92, %v91
    %v104 = vpack.c.b16 %v94, %v93
    %v105 = vpack.c.b16 %v96, %v95
    %v106 = vpack.c.b16 %v98, %v97
    %115 = vmatprep.subr.bf16.mxu0 0
    %116 = vmatpush1.bf16.msra.mxu0 %v99
    %117 = vmatprep.subr.bf16.mxu0 0
    %118 = vmatpush1.bf16.msra.mxu0 %v100
    %119 = vmatprep.subr.bf16.mxu0 0
    %120 = vmatpush1.bf16.msra.mxu0 %v101
    %121 = vmatprep.subr.bf16.mxu0 0
    %122 = vmatpush1.bf16.msra.mxu0 %v102
    %123 = vmatprep.subr.bf16.mxu0 0
    %124 = vmatpush1.bf16.msra.mxu0 %v103
    %125 = vmatprep.subr.bf16.mxu0 0
    %126 = vmatpush1.bf16.msra.mxu0 %v104
    %127 = vmatprep.subr.bf16.mxu0 0
    %128 = vmatpush1.bf16.msra.mxu0 %v105
    %129 = vmatprep.subr.bf16.mxu0 0
    %130 = vmatpush1.bf16.msra.mxu0 %v106
    %131 = vmatprep.subr.bf16.mxu0 0
    %132 = vmatpush1.bf16.msra.mxu0 0
    %133 = vmatprep.subr.bf16.mxu0 0
    %134 = vmatpush1.bf16.msra.mxu0 0
    %135 = vmatprep.subr.bf16.mxu0 0
    %136 = vmatpush1.bf16.msra.mxu0 0
    %137 = vmatprep.subr.bf16.mxu0 0
    %138 = vmatpush1.bf16.msra.mxu0 0
    %139 = vmatprep.subr.bf16.mxu0 0
    %140 = vmatpush1.bf16.msra.mxu0 0
    %141 = vmatprep.subr.bf16.mxu0 0
    %142 = vmatpush1.bf16.msra.mxu0 0
    %143 = vmatprep.subr.bf16.mxu0 0
    %144 = vmatpush1.bf16.msra.mxu0 0
    %145 = vmatprep.subr.bf16.mxu0 0
    %146 = vmatpush1.bf16.msra.mxu0 0
    %147 = vmatprep.mubr.bf16.mxu0 0
    %148 = vmatmul.mubr.bf16.gmra.mrb[0].mxu0 %v65
    %v149 = vpop.f32.mrb[0].mxu0
    %v150 = vadd.f32 0.0, %v149
    %v151 = vpop.f32.mrb[0].mxu0
    %v152 = vpop.f32.mrb[0].mxu0
    %v153 = vadd.f32 0.0, %v152
    %v154 = vpop.f32.mrb[0].mxu0
    %155 = vdwg.mxu0
    %v158 = vunpack.c.l.b16 %v25
    %v159 = vunpack.c.l.b16 %v26
    %v160 = vpack.c.b16 %v159, %v158
    %v178 = vunpack.c.l.b16 %v27
    %v179 = vunpack.c.l.b16 %v28
    %v180 = vunpack.c.l.b16 %v29
    %v181 = vunpack.c.l.b16 %v30
    %v182 = vunpack.c.l.b16 %v31
    %v183 = vunpack.c.l.b16 %v32
    %v184 = vunpack.c.l.b16 %v33
    %v185 = vunpack.c.l.b16 %v34
    %v186 = vunpack.c.l.b16 %v35
    %v187 = vunpack.c.l.b16 %v36
    %v188 = vunpack.c.l.b16 %v37
    %v189 = vunpack.c.l.b16 %v38
    %v190 = vunpack.c.l.b16 %v39
    %v191 = vunpack.c.l.b16 %v40
    %v192 = vunpack.c.l.b16 %v41
    %v193 = vunpack.c.l.b16 %v42
    %v194 = vpack.c.b16 %v179, %v178
    %v195 = vpack.c.b16 %v181, %v180
    %v196 = vpack.c.b16 %v183, %v182
    %v197 = vpack.c.b16 %v185, %v184
    %v198 = vpack.c.b16 %v187, %v186
    %v199 = vpack.c.b16 %v189, %v188
    %v200 = vpack.c.b16 %v191, %v190
    %v201 = vpack.c.b16 %v193, %v192
    %210 = vmatprep.subr.bf16.mxu0 0
    %211 = vmatpush1.bf16.msra.mxu0 %v194
    %212 = vmatprep.subr.bf16.mxu0 0
    %213 = vmatpush1.bf16.msra.mxu0 %v195
    %214 = vmatprep.subr.bf16.mxu0 0
    %215 = vmatpush1.bf16.msra.mxu0 %v196
    %216 = vmatprep.subr.bf16.mxu0 0
    %217 = vmatpush1.bf16.msra.mxu0 %v197
    %218 = vmatprep.subr.bf16.mxu0 0
    %219 = vmatpush1.bf16.msra.mxu0 %v198
    %220 = vmatprep.subr.bf16.mxu0 0
    %221 = vmatpush1.bf16.msra.mxu0 %v199
    %222 = vmatprep.subr.bf16.mxu0 0
    %223 = vmatpush1.bf16.msra.mxu0 %v200
    %224 = vmatprep.subr.bf16.mxu0 0
    %225 = vmatpush1.bf16.msra.mxu0 %v201
    %226 = vmatprep.subr.bf16.mxu0 0
    %227 = vmatpush1.bf16.msra.mxu0 0
    %228 = vmatprep.subr.bf16.mxu0 0
    %229 = vmatpush1.bf16.msra.mxu0 0
    %230 = vmatprep.subr.bf16.mxu0 0
    %231 = vmatpush1.bf16.msra.mxu0 0
    %232 = vmatprep.subr.bf16.mxu0 0
    %233 = vmatpush1.bf16.msra.mxu0 0
    %234 = vmatprep.subr.bf16.mxu0 0
    %235 = vmatpush1.bf16.msra.mxu0 0
    %236 = vmatprep.subr.bf16.mxu0 0
    %237 = vmatpush1.bf16.msra.mxu0 0
    %238 = vmatprep.subr.bf16.mxu0 0
    %239 = vmatpush1.bf16.msra.mxu0 0
    %240 = vmatprep.subr.bf16.mxu0 0
    %241 = vmatpush1.bf16.msra.mxu0 0
    %242 = vmatprep.mubr.bf16.mxu0 0
    %243 = vmatmul.mubr.bf16.gmra.mrb[0].mxu0 %v160
    %v244 = vpop.f32.mrb[0].mxu0
    %v245 = vadd.f32 %v150, %v244
    %v246 = vpop.f32.mrb[0].mxu0
    %v247 = vpop.f32.mrb[0].mxu0
    %v248 = vadd.f32 %v153, %v247
    %v249 = vpop.f32.mrb[0].mxu0
    %250 = vdwg.mxu0
    %v251 = vld [vmem:[%s2] sm:$0x1]
    %252 = vxpose.xlu0.b32.start [1/16] %v251, 128
    %253 = vxpose.xlu0.b32.cont [2/16] 0.0, 128
    %254 = vxpose.xlu0.b32.cont [3/16] 0.0, 128
    %255 = vxpose.xlu0.b32.cont [4/16] 0.0, 128
    %256 = vxpose.xlu0.b32.cont [5/16] 0.0, 128
    %257 = vxpose.xlu0.b32.cont [6/16] 0.0, 128
    %258 = vxpose.xlu0.b32.cont [7/16] 0.0, 128
    %259 = vxpose.xlu0.b32.cont [8/16] 0.0, 128
    %260 = vxpose.xlu0.b32.cont [9/16] 0.0, 128
    %261 = vxpose.xlu0.b32.cont [10/16] 0.0, 128
    %262 = vxpose.xlu0.b32.cont [11/16] 0.0, 128
    %263 = vxpose.xlu0.b32.cont [12/16] 0.0, 128
    %264 = vxpose.xlu0.b32.cont [13/16] 0.0, 128
    %265 = vxpose.xlu0.b32.cont [14/16] 0.0, 128
    %266 = vxpose.xlu0.b32.cont [15/16] 0.0, 128
    %267 = vxpose.xlu0.b32.end [16/16] 0.0, 128
    %v268 = vpop.trf.xlu0
    %v269 = vpop.trf.xlu0
    %v270 = vpop.trf.xlu0
    %v271 = vpop.trf.xlu0
    %v272 = vpop.trf.xlu0
    %v273 = vpop.trf.xlu0
    %v274 = vpop.trf.xlu0
    %v275 = vpop.trf.xlu0
    %v276 = vpop.trf.xlu0
    %v277 = vpop.trf.xlu0
    %v278 = vpop.trf.xlu0
    %v279 = vpop.trf.xlu0
    %v280 = vpop.trf.xlu0
    %v281 = vpop.trf.xlu0
    %v282 = vpop.trf.xlu0
    %v283 = vpop.trf.xlu0
    %v284 = vld [vmem:[%s5] sm:$0x1]
    %v285 = vld [vmem:[%s5 + $0x1] sm:$0x1]
    %287 = vset.pattern.permute.xlu0 0
    %288 = vperm.xlu0 %287, %v268
    %v289 = vpop.permute.xlu0 %288
    %292 = vset.pattern.permute.xlu0 0
    %293 = vperm.xlu0 %292, %v269
    %v294 = vpop.permute.xlu0 %293
    %v296 = vlaneseq
    %v297 = vshrl.u32 %v296, 7
    %v298 = vsub.s32 0, %v297
    %v299 = vrot.slane %v284, %v298
    %v300 = vmul.f32 %v289, %v299
    %v301 = vmul.f32 %v294, %v299
    %v302 = vadd.f32 %v245, %v300
    %v303 = vadd.f32 %v248, %v301
    %v304 = vlaneseq
    %v305 = vshrl.u32 %v304, 7
    %v306 = vsub.s32 0, %v305
    %v307 = vrot.slane %v285, %v306
    %v308 = vadd.f32 %v302, %v307
    %v309 = vadd.f32 %v303, %v307
    %v310 = vmax.f32 %v308, 0.0
    %v311 = vmax.f32 %v309, 0.0
    %v312 = vld [vmem:[%s5 + $0x2] sm:$0x1]
    %v313 = vld [vmem:[%s5 + $0x3] sm:$0x1]
    %s314 = vtos %v313
    %v315 = vlaneseq
    %v316 = vshrl.u32 %v315, 7
    %v317 = vsub.s32 0, %v316
    %v318 = vrot.slane %v312, %v317
    %v319 = vmul.f32 %v310, %v318
    %v320 = vmul.f32 %v311, %v318
    %vm321 = vcmask 523264
    %v322 = vsel %vm321, %v319, 0.0
    %323 = vadd.xlane.f32.xlu0 %v322
    %v324 = vpop.xlane.xlu0 %323
    %v325 = vsel %vm321, %v320, 0.0
    %326 = vadd.xlane.f32.xlu0 %v325
    %v327 = vpop.xlane.xlu0 %326
    %328 = vxpose.xlu0.b32.start [1/16] %v324, 128
    %329 = vxpose.xlu0.b32.cont [2/16] %v327, 128
    %330 = vxpose.xlu0.b32.cont [3/16] 0.0, 128
    %331 = vxpose.xlu0.b32.cont [4/16] 0.0, 128
    %332 = vxpose.xlu0.b32.cont [5/16] 0.0, 128
    %333 = vxpose.xlu0.b32.cont [6/16] 0.0, 128
    %334 = vxpose.xlu0.b32.cont [7/16] 0.0, 128
    %335 = vxpose.xlu0.b32.cont [8/16] 0.0, 128
    %336 = vxpose.xlu0.b32.cont [9/16] 0.0, 128
    %337 = vxpose.xlu0.b32.cont [10/16] 0.0, 128
    %338 = vxpose.xlu0.b32.cont [11/16] 0.0, 128
    %339 = vxpose.xlu0.b32.cont [12/16] 0.0, 128
    %340 = vxpose.xlu0.b32.cont [13/16] 0.0, 128
    %341 = vxpose.xlu0.b32.cont [14/16] 0.0, 128
    %342 = vxpose.xlu0.b32.cont [15/16] 0.0, 128
    %343 = vxpose.xlu0.b32.end [16/16] 0.0, 128
    %v344 = vpop.trf.xlu0
    %v345 = vpop.trf.xlu0
    %v346 = vpop.trf.xlu0
    %v347 = vpop.trf.xlu0
    %v348 = vpop.trf.xlu0
    %v349 = vpop.trf.xlu0
    %v350 = vpop.trf.xlu0
    %v351 = vpop.trf.xlu0
    %v352 = vpop.trf.xlu0
    %v353 = vpop.trf.xlu0
    %v354 = vpop.trf.xlu0
    %v355 = vpop.trf.xlu0
    %v356 = vpop.trf.xlu0
    %v357 = vpop.trf.xlu0
    %v358 = vpop.trf.xlu0
    %v359 = vpop.trf.xlu0
    %v360 = vstv %s314
    %v361 = vadd.f32 %v344, %v360
    %v362 = vxor.u32 %v361, 2147483648
    %v363 = vmul.f32 %v362, 1.442695
    %v364 = vpow.pop %v363
    %v365 = vadd.f32 %v364, 1.0
    %v366 = vrcp.pop %v365
    %v367 = vmul.f32 1.0, %v366
    %vm368 = vcmask 122880
    %369 = vst.msk [vmem:[#allocation2] sm:$0x1] %vm368, %v367
    // Predicated region
    $region26: #{tpu_custom_call.1} parent=1 // pred_check
      _
    $region27: #{tpu_custom_call.1} parent=1 // pred_check_branch
      %371 = sbr.rel (0) target = $region29
    $region28: #{tpu_custom_call.1} parent=1 // pred_region
      %s373 = ssub.s32 16, 16
      %374 = vsyncadd [#allocation3], %s373
      %s376 = sshll.u32 [#allocation2], 4
      %s377 = int_to_ptr.vmem [resolvable:$true] %s376
      %379 = dma.vmem_to_hbm [thread:$0]  %s377, 16, %s6, [#allocation3]
    $region29: #{tpu_custom_call.1} parent=1 // pred_fallthru
      _
    // Predicated region
    $region30: #{tpu_custom_call.1} parent=1 // pred_check
      _
    $region31: #{tpu_custom_call.1} parent=1 // pred_check_branch
      %381 = sbr.rel (0) target = $region33
    $region32: #{tpu_custom_call.1} parent=1 // pred_region
      %382 = dma.done [#allocation3], 16
    $region33: #{tpu_custom_call.1} parent=1 // pred_fallthru
      _
    %383 = vsyncpa [#allocation3], 1

</llo_original>
